<compile_context>
chip_gen: v6e
topology: v6e:2x2x1
jax: 0.10.0
libtpu: 0.0.40
codegen_flags: <defaults>
</compile_context>

<pallas_src>
import jax
import jax.numpy as jnp
from jax.experimental import pallas as pl
from jax.experimental.pallas import tpu as pltpu

LANE = 128      # TPU vreg lane width
SUB = 8         # f32 sublane height
TB_MAX = 256    # batch tile (rows / grid step); sized for v6e/v7x 256-wide MXU.
                # (v5e's 4x128x128 MXU saturates at 128; 256 still fits VMEM easily.)


def _round_up(x, m):
    return (x + m - 1) // m * m


# ----------------------------- Pallas kernel --------------------------------
def supp_head_kernel(ids_ref, emb_ref, wp_ref, bp_ref, w1_ref, b1_ref,
                     w2_ref, b2_ref, out_ref):
    """One batch tile: fused [CLS] gather + pooler + dense1/ReLU + dense2 + log-softmax."""
    tb = ids_ref.shape[0]
    vocab_pad = emb_ref.shape[0]

    # ---- fused embedding gather: one-hot(ids) @ emb_table on the MXU --------
    ids = ids_ref[...]                                                 # [TB, 1] int32
    onehot = ids == jax.lax.broadcasted_iota(jnp.int32, (tb, vocab_pad), 1)
    cls = jnp.dot(onehot.astype(jnp.bfloat16), emb_ref[...],
                  preferred_element_type=jnp.float32)                  # [TB, Hp] f32

    # ---- BERT pooler: tanh(cls @ Wp + bp)   (bf16 operands, f32 accumulate) --
    pooled = jnp.tanh(
        jnp.dot(cls.astype(jnp.bfloat16), wp_ref[...],
                preferred_element_type=jnp.float32) + bp_ref[...])

    # Dropout(p=0.1) -> identity in eval mode.

    # ---- dense1 + ReLU -------------------------------------------------------
    h = jnp.dot(pooled.astype(jnp.bfloat16), w1_ref[...],
                preferred_element_type=jnp.float32) + b1_ref[...]
    h = jnp.maximum(h, 0.0)

    # ---- dense2 --------------------------------------------------------------
    logits = jnp.dot(h.astype(jnp.bfloat16), w2_ref[...],
                     preferred_element_type=jnp.float32) + b2_ref[...]  # [TB, 128]

    # ---- LogSoftmax over the 2 real classes (cols 0, 1) ----------------------
    # Pairwise VPU math (no XLU cross-lane reduce, padded lanes excluded).
    a = logits[:, 0:1]
    b = logits[:, 1:2]
    m = jnp.maximum(a, b)
    lse = m + jnp.log(jnp.exp(a - m) + jnp.exp(b - m))                  # [TB, 1]

    # Lane-dense full-tile store; cols >= 2 carry junk and are sliced off outside.
    out_ref[...] = (logits - lse).astype(out_ref.dtype)


def supp_head(cls_ids, emb, wp, bp, w1, b1, w2, b2):
    """cls_ids: [B] int32 [CLS]-token ids.  Returns [B, 2] f32 log-probabilities."""
    B = cls_ids.shape[0]
    TB = min(TB_MAX, _round_up(B, SUB))
    B_pad = _round_up(B, TB)
    c_pad = b2.shape[1]

    # pad batch to a multiple of the tile; padded rows use id 0 and are discarded.
    ids = jnp.zeros((B_pad, 1), jnp.int32).at[:B, 0].set(cls_ids.astype(jnp.int32))

    # Weights/biases: block == full array, block index constant in the batch axis
    # -> DMA'd once, resident in VMEM for every grid step.
    const = lambda arr: pl.BlockSpec(arr.shape, lambda i: (0, 0))

    out = pl.pallas_call(
        supp_head_kernel,
        out_shape=jax.ShapeDtypeStruct((B_pad, c_pad), jnp.float32),
        grid=(B_pad // TB,),
        in_specs=[
            pl.BlockSpec((TB, 1), lambda i: (i, 0)),     # ids advance with batch tile
            const(emb), const(wp), const(bp),
            const(w1), const(b1),
            const(w2), const(b2),
        ],
        out_specs=pl.BlockSpec((TB, c_pad), lambda i: (i, 0)),
        compiler_params=pltpu.CompilerParams(
            # parallel batch axis -> megacore sharding on v7x, harmless on v5e/v6e
            dimension_semantics=("parallel",)),
    )(ids, emb, wp, bp, w1, b1, w2, b2)

    return out[:B, :2]


# --------------------------- parameter creation ------------------------------
def _kaiming_uniform(key, fan_in, shape):
    # matches nn.init.kaiming_uniform_ defaults: bound = sqrt(6 / fan_in)
    bound = jnp.sqrt(6.0 / fan_in)
    return jax.random.uniform(key, shape, jnp.float32, -bound, bound)


def _pad2(x, rows, cols, dtype):
    out = jnp.zeros((rows, cols), dtype)
    return out.at[:x.shape[0], :x.shape[1]].set(x.astype(dtype))


def make_params(key, vocab, hidden):
    ks = jax.random.split(key, 6)
    h_pad = _round_up(hidden, LANE)
    v_pad = _round_up(vocab, LANE)
    d1, d1_pad = 50, LANE
    nc, c_pad = 2, LANE

    emb_table = 0.02 * jax.random.normal(ks[0], (vocab, hidden), jnp.float32)
    wp = 0.02 * jax.random.normal(ks[1], (hidden, hidden), jnp.float32)
    bp = jnp.zeros((1, hidden), jnp.float32)
    w1 = _kaiming_uniform(ks[2], hidden, (hidden, d1))              # dense1: H -> 50
    b1 = jax.random.uniform(ks[3], (1, d1), jnp.float32,
                            -1.0 / jnp.sqrt(hidden), 1.0 / jnp.sqrt(hidden))
    w2 = _kaiming_uniform(ks[4], d1, (d1, nc))                      # dense2: 50 -> 2
    b2 = jax.random.uniform(ks[5], (1, nc), jnp.float32,
                            -1.0 / jnp.sqrt(float(d1)), 1.0 / jnp.sqrt(float(d1)))

    # Zero-pad every operand to lane-dense shapes.  Matmul operands are stored
    # in bf16 (halves HBM/VMEM bytes, full-rate MXU on v6e/v7x); biases stay
    # f32 and are added after the f32 accumulation.
    return (
        _pad2(emb_table, v_pad, h_pad, jnp.bfloat16),
        _pad2(wp, h_pad, h_pad, jnp.bfloat16),
        _pad2(bp, 1, h_pad, jnp.float32),
        _pad2(w1, h_pad, d1_pad, jnp.bfloat16),
        _pad2(b1, 1, d1_pad, jnp.float32),
        _pad2(w2, d1_pad, c_pad, jnp.bfloat16),
        _pad2(b2, 1, c_pad, jnp.float32),
    )


def supp_model_forward(inpids, params):
    emb, wp, bp, w1, b1, w2, b2 = params
    # [CLS]-token gather is fused inside the Pallas kernel (one-hot MXU matmul).
    return supp_head(inpids[:, 0], emb, wp, bp, w1, b1, w2, b2)


def supp_model_reference(inpids, params):
    """Pure-JAX reference mirroring the kernel's bf16-operand / f32-accumulate math."""
    emb, wp, bp, w1, b1, w2, b2 = params
    cls = emb[inpids[:, 0]].astype(jnp.float32)
    pooled = jnp.tanh(jnp.dot(cls.astype(jnp.bfloat16), wp,
                              preferred_element_type=jnp.float32) + bp)
    h = jnp.maximum(jnp.dot(pooled.astype(jnp.bfloat16), w1,
                            preferred_element_type=jnp.float32) + b1, 0.0)
    logits = jnp.dot(h.astype(jnp.bfloat16), w2,
                     preferred_element_type=jnp.float32) + b2
    return jax.nn.log_softmax(logits[:, :2], axis=1)


# --------------------------------- main --------------------------------------
if __name__ == "__main__":
    key = jax.random.PRNGKey(0)
    k_par, k_ids = jax.random.split(key)

    B, S, H, VOCAB = 2, 8, 32, 100
    params = make_params(k_par, VOCAB, H)
    inpids = jax.random.randint(k_ids, (B, S), 0, VOCAB, dtype=jnp.int32)

    out = supp_model_forward(inpids, params)
    out = jax.block_until_ready(out)

    assert out.shape == (B, 2)
    # log-softmax rows exponentiate-sum to 1
    row_sums = jnp.sum(jnp.exp(out), axis=1)
    assert jnp.allclose(row_sums, jnp.ones((B,)), atol=1e-5)
    # matches the pure-JAX reference
    ref = supp_model_reference(inpids, params)
    assert jnp.allclose(out, ref, atol=1e-2, rtol=1e-2)

    print("KERNEL_OK")
</pallas_src>

<mosaic_0001>
module attributes {stable_mosaic.version = 11 : i64} {
  func.func @supp_head_kernel(%arg0: i32, %arg1: memref<8x1xi32, #tpu.memory_space<vmem>>, %arg2: memref<128x128xbf16, #tpu.memory_space<vmem>>, %arg3: memref<128x128xbf16, #tpu.memory_space<vmem>>, %arg4: memref<1x128xf32, #tpu.memory_space<vmem>>, %arg5: memref<128x128xbf16, #tpu.memory_space<vmem>>, %arg6: memref<1x128xf32, #tpu.memory_space<vmem>>, %arg7: memref<128x128xbf16, #tpu.memory_space<vmem>>, %arg8: memref<1x128xf32, #tpu.memory_space<vmem>>, %arg9: memref<8x128xf32, #tpu.memory_space<vmem>>) attributes {dimension_semantics = [#tpu.dimension_semantics<parallel>], iteration_bounds = array<i64: 1>, scalar_prefetch = 0 : i64, scratch_operands = 0 : i64, tpu.core_type = #tpu.core_type<tc>, window_params = [{transform_indices = @transform_0, window_bounds = array<i64: 8, 1>}, {pipeline_mode = #tpu.pipeline_mode<synchronous>, transform_indices = @transform_1, window_bounds = array<i64: 128, 128>}, {pipeline_mode = #tpu.pipeline_mode<synchronous>, transform_indices = @transform_2, window_bounds = array<i64: 128, 128>}, {pipeline_mode = #tpu.pipeline_mode<synchronous>, transform_indices = @transform_3, window_bounds = array<i64: 1, 128>}, {pipeline_mode = #tpu.pipeline_mode<synchronous>, transform_indices = @transform_4, window_bounds = array<i64: 128, 128>}, {pipeline_mode = #tpu.pipeline_mode<synchronous>, transform_indices = @transform_5, window_bounds = array<i64: 1, 128>}, {pipeline_mode = #tpu.pipeline_mode<synchronous>, transform_indices = @transform_6, window_bounds = array<i64: 128, 128>}, {pipeline_mode = #tpu.pipeline_mode<synchronous>, transform_indices = @transform_7, window_bounds = array<i64: 1, 128>}, {transform_indices = @transform_8, window_bounds = array<i64: 8, 128>}]} {
    %c0 = arith.constant 0 : index
    %c0_0 = arith.constant 0 : index
    %0 = vector.load %arg1[%c0, %c0_0] : memref<8x1xi32, #tpu.memory_space<vmem>>, vector<8x1xi32>
    %1 = tpu.iota {dimensions = array<i32: 1>} : vector<8x128xi32>
    %2 = vector.broadcast %0 : vector<8x1xi32> to vector<8x128xi32>
    %3 = arith.cmpi eq, %2, %1 : vector<8x128xi32>
    %4 = arith.extui %3 : vector<8x128xi1> to vector<8x128xi32>
    %5 = arith.sitofp %4 : vector<8x128xi32> to vector<8x128xf32>
    %6 = arith.truncf %5 : vector<8x128xf32> to vector<8x128xbf16>
    %c0_1 = arith.constant 0 : index
    %c0_2 = arith.constant 0 : index
    %7 = vector.load %arg2[%c0_1, %c0_2] : memref<128x128xbf16, #tpu.memory_space<vmem>>, vector<128x128xbf16>
    %cst = arith.constant dense<0.000000e+00> : vector<8x128xf32>
    %8 = tpu.matmul %6, %7, %cst {dimension_numbers = #tpu.dot_dimension_numbers<[1], [0], [0], [1], [0, 0, 1, 1], [], []>} : vector<8x128xbf16>, vector<128x128xbf16>, vector<8x128xf32> -> vector<8x128xf32>
    %9 = arith.truncf %8 : vector<8x128xf32> to vector<8x128xbf16>
    %c0_3 = arith.constant 0 : index
    %c0_4 = arith.constant 0 : index
    %10 = vector.load %arg3[%c0_3, %c0_4] : memref<128x128xbf16, #tpu.memory_space<vmem>>, vector<128x128xbf16>
    %cst_5 = arith.constant dense<0.000000e+00> : vector<8x128xf32>
    %11 = tpu.matmul %9, %10, %cst_5 {dimension_numbers = #tpu.dot_dimension_numbers<[1], [0], [0], [1], [0, 0, 1, 1], [], []>} : vector<8x128xbf16>, vector<128x128xbf16>, vector<8x128xf32> -> vector<8x128xf32>
    %c0_6 = arith.constant 0 : index
    %c0_7 = arith.constant 0 : index
    %12 = vector.load %arg4[%c0_6, %c0_7] : memref<1x128xf32, #tpu.memory_space<vmem>>, vector<1x128xf32>
    %13 = vector.broadcast %12 : vector<1x128xf32> to vector<8x128xf32>
    %14 = arith.addf %11, %13 : vector<8x128xf32>
    %15 = math.tanh %14 : vector<8x128xf32>
    %16 = arith.truncf %15 : vector<8x128xf32> to vector<8x128xbf16>
    %c0_8 = arith.constant 0 : index
    %c0_9 = arith.constant 0 : index
    %17 = vector.load %arg5[%c0_8, %c0_9] : memref<128x128xbf16, #tpu.memory_space<vmem>>, vector<128x128xbf16>
    %cst_10 = arith.constant dense<0.000000e+00> : vector<8x128xf32>
    %18 = tpu.matmul %16, %17, %cst_10 {dimension_numbers = #tpu.dot_dimension_numbers<[1], [0], [0], [1], [0, 0, 1, 1], [], []>} : vector<8x128xbf16>, vector<128x128xbf16>, vector<8x128xf32> -> vector<8x128xf32>
    %c0_11 = arith.constant 0 : index
    %c0_12 = arith.constant 0 : index
    %19 = vector.load %arg6[%c0_11, %c0_12] : memref<1x128xf32, #tpu.memory_space<vmem>>, vector<1x128xf32>
    %20 = vector.broadcast %19 : vector<1x128xf32> to vector<8x128xf32>
    %21 = arith.addf %18, %20 : vector<8x128xf32>
    %cst_13 = arith.constant 0.000000e+00 : f32
    %22 = vector.broadcast %cst_13 : f32 to vector<8x128xf32>
    %23 = arith.maximumf %21, %22 : vector<8x128xf32>
    %24 = arith.truncf %23 : vector<8x128xf32> to vector<8x128xbf16>
    %c0_14 = arith.constant 0 : index
    %c0_15 = arith.constant 0 : index
    %25 = vector.load %arg7[%c0_14, %c0_15] : memref<128x128xbf16, #tpu.memory_space<vmem>>, vector<128x128xbf16>
    %cst_16 = arith.constant dense<0.000000e+00> : vector<8x128xf32>
    %26 = tpu.matmul %24, %25, %cst_16 {dimension_numbers = #tpu.dot_dimension_numbers<[1], [0], [0], [1], [0, 0, 1, 1], [], []>} : vector<8x128xbf16>, vector<128x128xbf16>, vector<8x128xf32> -> vector<8x128xf32>
    %c0_17 = arith.constant 0 : index
    %c0_18 = arith.constant 0 : index
    %27 = vector.load %arg8[%c0_17, %c0_18] : memref<1x128xf32, #tpu.memory_space<vmem>>, vector<1x128xf32>
    %28 = vector.broadcast %27 : vector<1x128xf32> to vector<8x128xf32>
    %29 = arith.addf %26, %28 : vector<8x128xf32>
    %30 = vector.extract_strided_slice %29 {offsets = [0, 0], sizes = [8, 1], strides = [1, 1]} : vector<8x128xf32> to vector<8x1xf32>
    %31 = vector.extract_strided_slice %29 {offsets = [0, 1], sizes = [8, 1], strides = [1, 1]} : vector<8x128xf32> to vector<8x1xf32>
    %32 = arith.maximumf %30, %31 : vector<8x1xf32>
    %33 = arith.subf %30, %32 : vector<8x1xf32>
    %34 = math.exp %33 : vector<8x1xf32>
    %35 = arith.subf %31, %32 : vector<8x1xf32>
    %36 = math.exp %35 : vector<8x1xf32>
    %37 = arith.addf %34, %36 : vector<8x1xf32>
    %38 = math.log %37 : vector<8x1xf32>
    %39 = arith.addf %32, %38 : vector<8x1xf32>
    %40 = vector.broadcast %39 : vector<8x1xf32> to vector<8x128xf32>
    %41 = arith.subf %29, %40 : vector<8x128xf32>
    %c0_19 = arith.constant 0 : index
    %c0_20 = arith.constant 0 : index
    %42 = vector.load %arg9[%c0_19, %c0_20] : memref<8x128xf32, #tpu.memory_space<vmem>>, vector<8x128xf32>
    tpu.vector_store %arg9[%c0_19, %c0_20], %41 {strides = array<i32>} : memref<8x128xf32, #tpu.memory_space<vmem>>, vector<8x128xf32>,
    return
  }
  func.func @transform_0(%arg0: i32) -> (i32, i32) {
    %c0_i32 = arith.constant 0 : i32
    %c0_i32_0 = arith.constant 0 : i32
    return %arg0, %c0_i32 : i32, i32
  }
  func.func @transform_1(%arg0: i32) -> (i32, i32) {
    %c0_i32 = arith.constant 0 : i32
    %c0_i32_0 = arith.constant 0 : i32
    %c0_i32_1 = arith.constant 0 : i32
    return %c0_i32, %c0_i32_0 : i32, i32
  }
  func.func @transform_2(%arg0: i32) -> (i32, i32) {
    %c0_i32 = arith.constant 0 : i32
    %c0_i32_0 = arith.constant 0 : i32
    %c0_i32_1 = arith.constant 0 : i32
    return %c0_i32, %c0_i32_0 : i32, i32
  }
  func.func @transform_3(%arg0: i32) -> (i32, i32) {
    %c0_i32 = arith.constant 0 : i32
    %c0_i32_0 = arith.constant 0 : i32
    %c0_i32_1 = arith.constant 0 : i32
    return %c0_i32, %c0_i32_0 : i32, i32
  }
  func.func @transform_4(%arg0: i32) -> (i32, i32) {
    %c0_i32 = arith.constant 0 : i32
    %c0_i32_0 = arith.constant 0 : i32
    %c0_i32_1 = arith.constant 0 : i32
    return %c0_i32, %c0_i32_0 : i32, i32
  }
  func.func @transform_5(%arg0: i32) -> (i32, i32) {
    %c0_i32 = arith.constant 0 : i32
    %c0_i32_0 = arith.constant 0 : i32
    %c0_i32_1 = arith.constant 0 : i32
    return %c0_i32, %c0_i32_0 : i32, i32
  }
  func.func @transform_6(%arg0: i32) -> (i32, i32) {
    %c0_i32 = arith.constant 0 : i32
    %c0_i32_0 = arith.constant 0 : i32
    %c0_i32_1 = arith.constant 0 : i32
    return %c0_i32, %c0_i32_0 : i32, i32
  }
  func.func @transform_7(%arg0: i32) -> (i32, i32) {
    %c0_i32 = arith.constant 0 : i32
    %c0_i32_0 = arith.constant 0 : i32
    %c0_i32_1 = arith.constant 0 : i32
    return %c0_i32, %c0_i32_0 : i32, i32
  }
  func.func @transform_8(%arg0: i32) -> (i32, i32) {
    %c0_i32 = arith.constant 0 : i32
    %c0_i32_0 = arith.constant 0 : i32
    return %arg0, %c0_i32 : i32, i32
  }
}

</mosaic_0001>

<llo_original>
// kernel: tpu_custom_call.1
$region0: #{tpu_custom_call.1}
  #allocation0 [shape = 'u32[]', space=smem, size = 0x4, offset = 0x4, fixed_abs, tag = 'smem constant byte address 0x4 - core index']
  #allocation1 [shape = 'u32[144,128]{1,0:T(1,128)}', space=vmem, size = 0x12000, scoped, tag = 'internal scratch']
  %s0 = inlined_call_operand.vmem [shape: s32[8,1], index: 0, kind: input, shape index: {}]
  %s1 = inlined_call_operand.hbm [shape: bf16[128,128], index: 1, kind: input, shape index: {}]
  %s2 = inlined_call_operand.hbm [shape: bf16[128,128], index: 2, kind: input, shape index: {}]
  %s3 = inlined_call_operand.vmem [shape: f32[1,128], index: 3, kind: input, shape index: {}]
  %s4 = inlined_call_operand.hbm [shape: bf16[128,128], index: 4, kind: input, shape index: {}]
  %s5 = inlined_call_operand.vmem [shape: f32[1,128], index: 5, kind: input, shape index: {}]
  %s6 = inlined_call_operand.hbm [shape: bf16[128,128], index: 6, kind: input, shape index: {}]
  %s7 = inlined_call_operand.vmem [shape: f32[1,128], index: 7, kind: input, shape index: {}]
  %s8 = inlined_call_operand.hbm [shape: f32[8,128], index: 8, kind: output, shape index: {}]
  %s9 = sld [smem:[#allocation0]]
  $region58: #{tpu_custom_call.1} parent=0
    _
  %s11 = ssub.s32 1, %s9
  %s12 = scalar_select 0, %s11, %s9
  $region1: #{tpu_custom_call.1} parent=0
    #allocation2 [shape = 'u8[32768]{0}', space=vmem, size = 0x8000, scoped, tag = 'input window, operand 1, single buffered']
    #allocation3 [shape = 's32[1]{0}', space=sflag, size = 0x4, scoped, tag = 'scoped memory for tpu_custom_call.1']
    #allocation4 [shape = 's32[1]{0}', space=sflag, size = 0x4, scoped, tag = 'scoped memory for tpu_custom_call.1']
    #allocation5 [shape = 'u8[32768]{0}', space=vmem, size = 0x8000, scoped, tag = 'input window, operand 2, single buffered']
    #allocation6 [shape = 's32[1]{0}', space=sflag, size = 0x4, scoped, tag = 'scoped memory for tpu_custom_call.1']
    #allocation7 [shape = 'u8[32768]{0}', space=vmem, size = 0x8000, scoped, tag = 'input window, operand 4, single buffered']
    #allocation8 [shape = 'u8[32768]{0}', space=vmem, size = 0x8000, scoped, tag = 'input window, operand 6, single buffered']
    #allocation9 [shape = 's32[1]{0}', space=sflag, size = 0x4, scoped, tag = 'scoped memory for tpu_custom_call.1']
    #allocation10 [shape = 'u8[4096]{0}', space=vmem, size = 0x1000, scoped, tag = 'output window, operand 0, single buffered']
    %13 = vsyncpa [#allocation3], 0
    %14 = vsyncpa [#allocation6], 0
    %15 = vsyncpa [#allocation9], 0
    %16 = vsyncpa [#allocation4], 0
    // Predicated region
    $region2: #{tpu_custom_call.1} parent=1 // pred_check
      _
    $region3: #{tpu_custom_call.1} parent=1 // pred_check_branch
      %18 = sbr.rel (0) target = $region5
    $region4: #{tpu_custom_call.1} parent=1 // pred_region
      _
    $region5: #{tpu_custom_call.1} parent=1 // pred_fallthru
      _
    // Predicated region
    $region6: #{tpu_custom_call.1} parent=1 // pred_check
      _
    $region7: #{tpu_custom_call.1} parent=1 // pred_check_branch
      %20 = sbr.rel (0) target = $region9
    $region8: #{tpu_custom_call.1} parent=1 // pred_region
      %s22 = ssub.s32 1024, 1024
      %23 = vsyncadd [#allocation3], %s22
      %s24 = sshll.u32 [#allocation2], 4
      %s25 = int_to_ptr.vmem [resolvable:$true] %s24
      %30 = dma.hbm_to_vmem [thread:$0]  %s1, 1024, %s25, [#allocation3], 64, 64, 4
    $region9: #{tpu_custom_call.1} parent=1 // pred_fallthru
      _
    // Predicated region
    $region10: #{tpu_custom_call.1} parent=1 // pred_check
      _
    $region11: #{tpu_custom_call.1} parent=1 // pred_check_branch
      %32 = sbr.rel (0) target = $region13
    $region12: #{tpu_custom_call.1} parent=1 // pred_region
      %s34 = ssub.s32 1024, 1024
      %35 = vsyncadd [#allocation6], %s34
      %s36 = sshll.u32 [#allocation5], 4
      %s37 = int_to_ptr.vmem [resolvable:$true] %s36
      %42 = dma.hbm_to_vmem [thread:$0]  %s2, 1024, %s37, [#allocation6], 64, 64, 4
    $region13: #{tpu_custom_call.1} parent=1 // pred_fallthru
      _
    // Predicated region
    $region14: #{tpu_custom_call.1} parent=1 // pred_check
      _
    $region15: #{tpu_custom_call.1} parent=1 // pred_check_branch
      %44 = sbr.rel (0) target = $region17
    $region16: #{tpu_custom_call.1} parent=1 // pred_region
      _
    $region17: #{tpu_custom_call.1} parent=1 // pred_fallthru
      _
    // Predicated region
    $region18: #{tpu_custom_call.1} parent=1 // pred_check
      _
    $region19: #{tpu_custom_call.1} parent=1 // pred_check_branch
      %46 = sbr.rel (0) target = $region21
    $region20: #{tpu_custom_call.1} parent=1 // pred_region
      %s48 = ssub.s32 1024, 1024
      %49 = vsyncadd [#allocation6], %s48
      %s50 = sshll.u32 [#allocation7], 4
      %s51 = int_to_ptr.vmem [resolvable:$true] %s50
      %56 = dma.hbm_to_vmem [thread:$0]  %s4, 1024, %s51, [#allocation6], 64, 64, 4
    $region21: #{tpu_custom_call.1} parent=1 // pred_fallthru
      _
    // Predicated region
    $region22: #{tpu_custom_call.1} parent=1 // pred_check
      _
    $region23: #{tpu_custom_call.1} parent=1 // pred_check_branch
      %58 = sbr.rel (0) target = $region25
    $region24: #{tpu_custom_call.1} parent=1 // pred_region
      _
    $region25: #{tpu_custom_call.1} parent=1 // pred_fallthru
      _
    // Predicated region
    $region26: #{tpu_custom_call.1} parent=1 // pred_check
      _
    $region27: #{tpu_custom_call.1} parent=1 // pred_check_branch
      %60 = sbr.rel (0) target = $region29
    $region28: #{tpu_custom_call.1} parent=1 // pred_region
      %s62 = ssub.s32 1024, 1024
      %63 = vsyncadd [#allocation9], %s62
      %s64 = sshll.u32 [#allocation8], 4
      %s65 = int_to_ptr.vmem [resolvable:$true] %s64
      %70 = dma.hbm_to_vmem [thread:$0]  %s6, 1024, %s65, [#allocation9], 64, 64, 4
    $region29: #{tpu_custom_call.1} parent=1 // pred_fallthru
      _
    // Predicated region
    $region30: #{tpu_custom_call.1} parent=1 // pred_check
      _
    $region31: #{tpu_custom_call.1} parent=1 // pred_check_branch
      %72 = sbr.rel (0) target = $region33
    $region32: #{tpu_custom_call.1} parent=1 // pred_region
      _
    $region33: #{tpu_custom_call.1} parent=1 // pred_fallthru
      _
    // Predicated region
    $region34: #{tpu_custom_call.1} parent=1 // pred_check
      _
    $region35: #{tpu_custom_call.1} parent=1 // pred_check_branch
      %74 = sbr.rel (0) target = $region37
    $region36: #{tpu_custom_call.1} parent=1 // pred_region
      %75 = dma.done [#allocation3], 1024
    $region37: #{tpu_custom_call.1} parent=1 // pred_fallthru
      _
    // Predicated region
    $region38: #{tpu_custom_call.1} parent=1 // pred_check
      _
    $region39: #{tpu_custom_call.1} parent=1 // pred_check_branch
      %77 = sbr.rel (0) target = $region41
    $region40: #{tpu_custom_call.1} parent=1 // pred_region
      %78 = dma.done [#allocation6], 1024
    $region41: #{tpu_custom_call.1} parent=1 // pred_fallthru
      _
    // Predicated region
    $region42: #{tpu_custom_call.1} parent=1 // pred_check
      _
    $region43: #{tpu_custom_call.1} parent=1 // pred_check_branch
      %80 = sbr.rel (0) target = $region45
    $region44: #{tpu_custom_call.1} parent=1 // pred_region
      %81 = dma.done [#allocation6], 1024
    $region45: #{tpu_custom_call.1} parent=1 // pred_fallthru
      _
    // Predicated region
    $region46: #{tpu_custom_call.1} parent=1 // pred_check
      _
    $region47: #{tpu_custom_call.1} parent=1 // pred_check_branch
      %83 = sbr.rel (0) target = $region49
    $region48: #{tpu_custom_call.1} parent=1 // pred_region
      %84 = dma.done [#allocation9], 1024
    $region49: #{tpu_custom_call.1} parent=1 // pred_fallthru
      _
    %v86 = vld [vmem:[%s0] sm:$0xff]
    %v87 = vlaneseq
    %v88 = vand.u32 %v87, 127
    %89 = vset.pattern.permute.xlu0 0
    %90 = vperm.xlu0 %89, %v86
    %v91 = vpop.permute.xlu0 %90
    %vm92 = vcmp.eq.s32.totalorder %v91, %v88
    %v93 = vsel %vm92, 1, 0
    %v94 = vcvt.s32.f32 %v93
    %v95 = vpack.c.bf16 %v94, %v94
    %v96 = vld [vmem:[#allocation2] sm:$0xf]
    %v97 = vld [vmem:[#allocation2 + $0x4] sm:$0xf]
    %v98 = vld [vmem:[#allocation2 + $0x8] sm:$0xf]
    %v99 = vld [vmem:[#allocation2 + $0xc] sm:$0xf]
    %v100 = vld [vmem:[#allocation2 + $0x10] sm:$0xf]
    %v101 = vld [vmem:[#allocation2 + $0x14] sm:$0xf]
    %v102 = vld [vmem:[#allocation2 + $0x18] sm:$0xf]
    %v103 = vld [vmem:[#allocation2 + $0x1c] sm:$0xf]
    %v104 = vld [vmem:[#allocation2 + $0x20] sm:$0xf]
    %v105 = vld [vmem:[#allocation2 + $0x24] sm:$0xf]
    %v106 = vld [vmem:[#allocation2 + $0x28] sm:$0xf]
    %v107 = vld [vmem:[#allocation2 + $0x2c] sm:$0xf]
    %v108 = vld [vmem:[#allocation2 + $0x30] sm:$0xf]
    %v109 = vld [vmem:[#allocation2 + $0x34] sm:$0xf]
    %v110 = vld [vmem:[#allocation2 + $0x38] sm:$0xf]
    %v111 = vld [vmem:[#allocation2 + $0x3c] sm:$0xf]
    %v128 = vunpack.c.l.b16 %v96
    %v129 = vunpack.c.l.b16 %v97
    %v130 = vunpack.c.l.b16 %v98
    %v131 = vunpack.c.l.b16 %v99
    %v132 = vunpack.c.l.b16 %v100
    %v133 = vunpack.c.l.b16 %v101
    %v134 = vunpack.c.l.b16 %v102
    %v135 = vunpack.c.l.b16 %v103
    %v136 = vunpack.c.l.b16 %v104
    %v137 = vunpack.c.l.b16 %v105
    %v138 = vunpack.c.l.b16 %v106
    %v139 = vunpack.c.l.b16 %v107
    %v140 = vunpack.c.l.b16 %v108
    %v141 = vunpack.c.l.b16 %v109
    %v142 = vunpack.c.l.b16 %v110
    %v143 = vunpack.c.l.b16 %v111
    %v144 = vpack.c.b16 %v129, %v128
    %v145 = vpack.c.b16 %v131, %v130
    %v146 = vpack.c.b16 %v133, %v132
    %v147 = vpack.c.b16 %v135, %v134
    %v148 = vpack.c.b16 %v137, %v136
    %v149 = vpack.c.b16 %v139, %v138
    %v150 = vpack.c.b16 %v141, %v140
    %v151 = vpack.c.b16 %v143, %v142
    %160 = vmatprep.subr.bf16.mxu0 0
    %161 = vmatpush1.bf16.msra.mxu0 %v151
    %162 = vmatprep.subr.bf16.mxu0 0
    %163 = vmatpush1.bf16.msra.mxu0 %v150
    %164 = vmatprep.subr.bf16.mxu0 0
    %165 = vmatpush1.bf16.msra.mxu0 %v149
    %166 = vmatprep.subr.bf16.mxu0 0
    %167 = vmatpush1.bf16.msra.mxu0 %v148
    %168 = vmatprep.subr.bf16.mxu0 0
    %169 = vmatpush1.bf16.msra.mxu0 %v147
    %170 = vmatprep.subr.bf16.mxu0 0
    %171 = vmatpush1.bf16.msra.mxu0 %v146
    %172 = vmatprep.subr.bf16.mxu0 0
    %173 = vmatpush1.bf16.msra.mxu0 %v145
    %174 = vmatprep.subr.bf16.mxu0 0
    %175 = vmatpush1.bf16.msra.mxu0 %v144
    %176 = vmatprep.subr.bf16.mxu0 0
    %177 = vmatpush2.bf16.msra.mxu0 0
    %178 = vmatprep.subr.bf16.mxu0 0
    %179 = vmatpush2.bf16.msra.mxu0 0
    %180 = vmatprep.subr.bf16.mxu0 0
    %181 = vmatpush2.bf16.msra.mxu0 0
    %182 = vmatprep.subr.bf16.mxu0 0
    %183 = vmatpush2.bf16.msra.mxu0 0
    %184 = vmatprep.subr.bf16.mxu0 0
    %185 = vmatpush2.bf16.msra.mxu0 0
    %186 = vmatprep.subr.bf16.mxu0 0
    %187 = vmatpush2.bf16.msra.mxu0 0
    %188 = vmatprep.subr.bf16.mxu0 0
    %189 = vmatpush2.bf16.msra.mxu0 0
    %190 = vmatprep.subr.bf16.mxu0 0
    %191 = vmatpush2.bf16.msra.mxu0 0
    %192 = vmatprep.mubr.bf16.mxu0 0
    %193 = vmatmul.mubr.bf16.gmra.mxu0 %v95
    %v194 = vpop.f32.mrf.mxu0
    %v195 = vadd.f32 0.0, %v194
    %v196 = vpop.f32.mrf.mxu0
    %v197 = vpop.f32.mrf.mxu0
    %v198 = vpop.f32.mrf.mxu0
    %199 = vdwg.mxu0
    %v200 = vpack.c.bf16 %v195, %v195
    %v201 = vld [vmem:[#allocation5] sm:$0xf]
    %v202 = vld [vmem:[#allocation5 + $0x4] sm:$0xf]
    %v203 = vld [vmem:[#allocation5 + $0x8] sm:$0xf]
    %v204 = vld [vmem:[#allocation5 + $0xc] sm:$0xf]
    %v205 = vld [vmem:[#allocation5 + $0x10] sm:$0xf]
    %v206 = vld [vmem:[#allocation5 + $0x14] sm:$0xf]
    %v207 = vld [vmem:[#allocation5 + $0x18] sm:$0xf]
    %v208 = vld [vmem:[#allocation5 + $0x1c] sm:$0xf]
    %v209 = vld [vmem:[#allocation5 + $0x20] sm:$0xf]
    %v210 = vld [vmem:[#allocation5 + $0x24] sm:$0xf]
    %v211 = vld [vmem:[#allocation5 + $0x28] sm:$0xf]
    %v212 = vld [vmem:[#allocation5 + $0x2c] sm:$0xf]
    %v213 = vld [vmem:[#allocation5 + $0x30] sm:$0xf]
    %v214 = vld [vmem:[#allocation5 + $0x34] sm:$0xf]
    %v215 = vld [vmem:[#allocation5 + $0x38] sm:$0xf]
    %v216 = vld [vmem:[#allocation5 + $0x3c] sm:$0xf]
    %v217 = vld [vmem:[%s3] sm:$0x1]
    %v219 = vlaneseq
    %v220 = vshrl.u32 %v219, 7
    %v221 = vsub.s32 0, %v220
    %v222 = vrot.slane %v217, %v221
    %v240 = vunpack.c.l.b16 %v201
    %v241 = vunpack.c.l.b16 %v202
    %v242 = vunpack.c.l.b16 %v203
    %v243 = vunpack.c.l.b16 %v204
    %v244 = vunpack.c.l.b16 %v205
    %v245 = vunpack.c.l.b16 %v206
    %v246 = vunpack.c.l.b16 %v207
    %v247 = vunpack.c.l.b16 %v208
    %v248 = vunpack.c.l.b16 %v209
    %v249 = vunpack.c.l.b16 %v210
    %v250 = vunpack.c.l.b16 %v211
    %v251 = vunpack.c.l.b16 %v212
    %v252 = vunpack.c.l.b16 %v213
    %v253 = vunpack.c.l.b16 %v214
    %v254 = vunpack.c.l.b16 %v215
    %v255 = vunpack.c.l.b16 %v216
    %v256 = vpack.c.b16 %v241, %v240
    %v257 = vpack.c.b16 %v243, %v242
    %v258 = vpack.c.b16 %v245, %v244
    %v259 = vpack.c.b16 %v247, %v246
    %v260 = vpack.c.b16 %v249, %v248
    %v261 = vpack.c.b16 %v251, %v250
    %v262 = vpack.c.b16 %v253, %v252
    %v263 = vpack.c.b16 %v255, %v254
    %272 = vmatprep.subr.bf16.mxu0 0
    %273 = vmatpush1.bf16.msra.mxu0 %v263
    %274 = vmatprep.subr.bf16.mxu0 0
    %275 = vmatpush1.bf16.msra.mxu0 %v262
    %276 = vmatprep.subr.bf16.mxu0 0
    %277 = vmatpush1.bf16.msra.mxu0 %v261
    %278 = vmatprep.subr.bf16.mxu0 0
    %279 = vmatpush1.bf16.msra.mxu0 %v260
    %280 = vmatprep.subr.bf16.mxu0 0
    %281 = vmatpush1.bf16.msra.mxu0 %v259
    %282 = vmatprep.subr.bf16.mxu0 0
    %283 = vmatpush1.bf16.msra.mxu0 %v258
    %284 = vmatprep.subr.bf16.mxu0 0
    %285 = vmatpush1.bf16.msra.mxu0 %v257
    %286 = vmatprep.subr.bf16.mxu0 0
    %287 = vmatpush1.bf16.msra.mxu0 %v256
    %288 = vmatprep.subr.bf16.mxu0 0
    %289 = vmatpush2.bf16.msra.mxu0 0
    %290 = vmatprep.subr.bf16.mxu0 0
    %291 = vmatpush2.bf16.msra.mxu0 0
    %292 = vmatprep.subr.bf16.mxu0 0
    %293 = vmatpush2.bf16.msra.mxu0 0
    %294 = vmatprep.subr.bf16.mxu0 0
    %295 = vmatpush2.bf16.msra.mxu0 0
    %296 = vmatprep.subr.bf16.mxu0 0
    %297 = vmatpush2.bf16.msra.mxu0 0
    %298 = vmatprep.subr.bf16.mxu0 0
    %299 = vmatpush2.bf16.msra.mxu0 0
    %300 = vmatprep.subr.bf16.mxu0 0
    %301 = vmatpush2.bf16.msra.mxu0 0
    %302 = vmatprep.subr.bf16.mxu0 0
    %303 = vmatpush2.bf16.msra.mxu0 0
    %304 = vmatprep.mubr.bf16.mxu0 0
    %305 = vmatmul.mubr.bf16.gmra.mxu0 %v200
    %v306 = vpop.f32.mrf.mxu0
    %v307 = vadd.f32 %v222, %v306
    %v308 = vpop.f32.mrf.mxu0
    %v309 = vpop.f32.mrf.mxu0
    %v310 = vpop.f32.mrf.mxu0
    %311 = vdwg.mxu0
    %v312 = vtanh.pop %v307
    %v313 = vpack.c.bf16 %v312, %v312
    %v314 = vld [vmem:[#allocation7] sm:$0xf]
    %v315 = vld [vmem:[#allocation7 + $0x4] sm:$0xf]
    %v316 = vld [vmem:[#allocation7 + $0x8] sm:$0xf]
    %v317 = vld [vmem:[#allocation7 + $0xc] sm:$0xf]
    %v318 = vld [vmem:[#allocation7 + $0x10] sm:$0xf]
    %v319 = vld [vmem:[#allocation7 + $0x14] sm:$0xf]
    %v320 = vld [vmem:[#allocation7 + $0x18] sm:$0xf]
    %v321 = vld [vmem:[#allocation7 + $0x1c] sm:$0xf]
    %v322 = vld [vmem:[#allocation7 + $0x20] sm:$0xf]
    %v323 = vld [vmem:[#allocation7 + $0x24] sm:$0xf]
    %v324 = vld [vmem:[#allocation7 + $0x28] sm:$0xf]
    %v325 = vld [vmem:[#allocation7 + $0x2c] sm:$0xf]
    %v326 = vld [vmem:[#allocation7 + $0x30] sm:$0xf]
    %v327 = vld [vmem:[#allocation7 + $0x34] sm:$0xf]
    %v328 = vld [vmem:[#allocation7 + $0x38] sm:$0xf]
    %v329 = vld [vmem:[#allocation7 + $0x3c] sm:$0xf]
    %v330 = vld [vmem:[%s5] sm:$0x1]
    %v332 = vlaneseq
    %v333 = vshrl.u32 %v332, 7
    %v334 = vsub.s32 0, %v333
    %v335 = vrot.slane %v330, %v334
    %v353 = vunpack.c.l.b16 %v314
    %v354 = vunpack.c.l.b16 %v315
    %v355 = vunpack.c.l.b16 %v316
    %v356 = vunpack.c.l.b16 %v317
    %v357 = vunpack.c.l.b16 %v318
    %v358 = vunpack.c.l.b16 %v319
    %v359 = vunpack.c.l.b16 %v320
    %v360 = vunpack.c.l.b16 %v321
    %v361 = vunpack.c.l.b16 %v322
    %v362 = vunpack.c.l.b16 %v323
    %v363 = vunpack.c.l.b16 %v324
    %v364 = vunpack.c.l.b16 %v325
    %v365 = vunpack.c.l.b16 %v326
    %v366 = vunpack.c.l.b16 %v327
    %v367 = vunpack.c.l.b16 %v328
    %v368 = vunpack.c.l.b16 %v329
    %v369 = vpack.c.b16 %v354, %v353
    %v370 = vpack.c.b16 %v356, %v355
    %v371 = vpack.c.b16 %v358, %v357
    %v372 = vpack.c.b16 %v360, %v359
    %v373 = vpack.c.b16 %v362, %v361
    %v374 = vpack.c.b16 %v364, %v363
    %v375 = vpack.c.b16 %v366, %v365
    %v376 = vpack.c.b16 %v368, %v367
    %385 = vmatprep.subr.bf16.mxu0 0
    %386 = vmatpush1.bf16.msra.mxu0 %v376
    %387 = vmatprep.subr.bf16.mxu0 0
    %388 = vmatpush1.bf16.msra.mxu0 %v375
    %389 = vmatprep.subr.bf16.mxu0 0
    %390 = vmatpush1.bf16.msra.mxu0 %v374
    %391 = vmatprep.subr.bf16.mxu0 0
    %392 = vmatpush1.bf16.msra.mxu0 %v373
    %393 = vmatprep.subr.bf16.mxu0 0
    %394 = vmatpush1.bf16.msra.mxu0 %v372
    %395 = vmatprep.subr.bf16.mxu0 0
    %396 = vmatpush1.bf16.msra.mxu0 %v371
    %397 = vmatprep.subr.bf16.mxu0 0
    %398 = vmatpush1.bf16.msra.mxu0 %v370
    %399 = vmatprep.subr.bf16.mxu0 0
    %400 = vmatpush1.bf16.msra.mxu0 %v369
    %401 = vmatprep.subr.bf16.mxu0 0
    %402 = vmatpush2.bf16.msra.mxu0 0
    %403 = vmatprep.subr.bf16.mxu0 0
    %404 = vmatpush2.bf16.msra.mxu0 0
    %405 = vmatprep.subr.bf16.mxu0 0
    %406 = vmatpush2.bf16.msra.mxu0 0
    %407 = vmatprep.subr.bf16.mxu0 0
    %408 = vmatpush2.bf16.msra.mxu0 0
    %409 = vmatprep.subr.bf16.mxu0 0
    %410 = vmatpush2.bf16.msra.mxu0 0
    %411 = vmatprep.subr.bf16.mxu0 0
    %412 = vmatpush2.bf16.msra.mxu0 0
    %413 = vmatprep.subr.bf16.mxu0 0
    %414 = vmatpush2.bf16.msra.mxu0 0
    %415 = vmatprep.subr.bf16.mxu0 0
    %416 = vmatpush2.bf16.msra.mxu0 0
    %417 = vmatprep.mubr.bf16.mxu0 0
    %418 = vmatmul.mubr.bf16.gmra.mxu0 %v313
    %v419 = vpop.f32.mrf.mxu0
    %v420 = vadd.f32 %v335, %v419
    %v421 = vpop.f32.mrf.mxu0
    %v422 = vpop.f32.mrf.mxu0
    %v423 = vpop.f32.mrf.mxu0
    %424 = vdwg.mxu0
    %v425 = vmax.f32 %v420, 0.0
    %v426 = vpack.c.bf16 %v425, %v425
    %v427 = vld [vmem:[#allocation8] sm:$0xf]
    %v428 = vld [vmem:[#allocation8 + $0x4] sm:$0xf]
    %v429 = vld [vmem:[#allocation8 + $0x8] sm:$0xf]
    %v430 = vld [vmem:[#allocation8 + $0xc] sm:$0xf]
    %v431 = vld [vmem:[#allocation8 + $0x10] sm:$0xf]
    %v432 = vld [vmem:[#allocation8 + $0x14] sm:$0xf]
    %v433 = vld [vmem:[#allocation8 + $0x18] sm:$0xf]
    %v434 = vld [vmem:[#allocation8 + $0x1c] sm:$0xf]
    %v435 = vld [vmem:[#allocation8 + $0x20] sm:$0xf]
    %v436 = vld [vmem:[#allocation8 + $0x24] sm:$0xf]
    %v437 = vld [vmem:[#allocation8 + $0x28] sm:$0xf]
    %v438 = vld [vmem:[#allocation8 + $0x2c] sm:$0xf]
    %v439 = vld [vmem:[#allocation8 + $0x30] sm:$0xf]
    %v440 = vld [vmem:[#allocation8 + $0x34] sm:$0xf]
    %v441 = vld [vmem:[#allocation8 + $0x38] sm:$0xf]
    %v442 = vld [vmem:[#allocation8 + $0x3c] sm:$0xf]
    %v443 = vld [vmem:[%s7] sm:$0x1]
    %v445 = vlaneseq
    %v446 = vshrl.u32 %v445, 7
    %v447 = vsub.s32 0, %v446
    %v448 = vrot.slane %v443, %v447
    %v466 = vunpack.c.l.b16 %v427
    %v467 = vunpack.c.l.b16 %v428
    %v468 = vunpack.c.l.b16 %v429
    %v469 = vunpack.c.l.b16 %v430
    %v470 = vunpack.c.l.b16 %v431
    %v471 = vunpack.c.l.b16 %v432
    %v472 = vunpack.c.l.b16 %v433
    %v473 = vunpack.c.l.b16 %v434
    %v474 = vunpack.c.l.b16 %v435
    %v475 = vunpack.c.l.b16 %v436
    %v476 = vunpack.c.l.b16 %v437
    %v477 = vunpack.c.l.b16 %v438
    %v478 = vunpack.c.l.b16 %v439
    %v479 = vunpack.c.l.b16 %v440
    %v480 = vunpack.c.l.b16 %v441
    %v481 = vunpack.c.l.b16 %v442
    %v482 = vpack.c.b16 %v467, %v466
    %v483 = vpack.c.b16 %v469, %v468
    %v484 = vpack.c.b16 %v471, %v470
    %v485 = vpack.c.b16 %v473, %v472
    %v486 = vpack.c.b16 %v475, %v474
    %v487 = vpack.c.b16 %v477, %v476
    %v488 = vpack.c.b16 %v479, %v478
    %v489 = vpack.c.b16 %v481, %v480
    %498 = vmatprep.subr.bf16.mxu0 0
    %499 = vmatpush1.bf16.msra.mxu0 %v489
    %500 = vmatprep.subr.bf16.mxu0 0
    %501 = vmatpush1.bf16.msra.mxu0 %v488
    %502 = vmatprep.subr.bf16.mxu0 0
    %503 = vmatpush1.bf16.msra.mxu0 %v487
    %504 = vmatprep.subr.bf16.mxu0 0
    %505 = vmatpush1.bf16.msra.mxu0 %v486
    %506 = vmatprep.subr.bf16.mxu0 0
    %507 = vmatpush1.bf16.msra.mxu0 %v485
    %508 = vmatprep.subr.bf16.mxu0 0
    %509 = vmatpush1.bf16.msra.mxu0 %v484
    %510 = vmatprep.subr.bf16.mxu0 0
    %511 = vmatpush1.bf16.msra.mxu0 %v483
    %512 = vmatprep.subr.bf16.mxu0 0
    %513 = vmatpush1.bf16.msra.mxu0 %v482
    %514 = vmatprep.subr.bf16.mxu0 0
    %515 = vmatpush2.bf16.msra.mxu0 0
    %516 = vmatprep.subr.bf16.mxu0 0
    %517 = vmatpush2.bf16.msra.mxu0 0
    %518 = vmatprep.subr.bf16.mxu0 0
    %519 = vmatpush2.bf16.msra.mxu0 0
    %520 = vmatprep.subr.bf16.mxu0 0
    %521 = vmatpush2.bf16.msra.mxu0 0
    %522 = vmatprep.subr.bf16.mxu0 0
    %523 = vmatpush2.bf16.msra.mxu0 0
    %524 = vmatprep.subr.bf16.mxu0 0
    %525 = vmatpush2.bf16.msra.mxu0 0
    %526 = vmatprep.subr.bf16.mxu0 0
    %527 = vmatpush2.bf16.msra.mxu0 0
    %528 = vmatprep.subr.bf16.mxu0 0
    %529 = vmatpush2.bf16.msra.mxu0 0
    %530 = vmatprep.mubr.bf16.mxu0 0
    %531 = vmatmul.mubr.bf16.gmra.mxu0 %v426
    %v532 = vpop.f32.mrf.mxu0
    %v533 = vadd.f32 %v448, %v532
    %v534 = vpop.f32.mrf.mxu0
    %v535 = vpop.f32.mrf.mxu0
    %v536 = vpop.f32.mrf.mxu0
    %537 = vdwg.mxu0
    %539 = vrot.lane.b32.xlu0 %v533, 127
    %v540 = vpop.permute.xlu0 %539
    %v542 = vmax.f32 %v533, %v540
    %v543 = vsub.f32 %v533, %v542
    %v544 = vmul.f32 %v543, 1.442695
    %v545 = vpow.pop %v544
    %547 = vrot.lane.b32.xlu0 %v542, 1
    %v548 = vpop.permute.xlu0 %547
    %v550 = vsub.f32 %v533, %v548
    %v551 = vmul.f32 %v550, 1.442695
    %v552 = vpow.pop %v551
    %554 = vrot.lane.b32.xlu0 %v552, 127
    %v555 = vpop.permute.xlu0 %554
    %v557 = vadd.f32 %v545, %v555
    %v558 = vlog2.pop %v557
    %v559 = vmul.f32 %v558, 0.6931472
    %v560 = vadd.f32 %v542, %v559
    %562 = vset.pattern.permute.xlu0 0
    %563 = vperm.xlu0 %562, %v560
    %v564 = vpop.permute.xlu0 %563
    %v566 = vsub.f32 %v533, %v564
    %567 = vst [vmem:[#allocation10] sm:$0xff] %v566
    // Predicated region
    $region50: #{tpu_custom_call.1} parent=1 // pred_check
      _
    $region51: #{tpu_custom_call.1} parent=1 // pred_check_branch
      %569 = sbr.rel (0) target = $region53
    $region52: #{tpu_custom_call.1} parent=1 // pred_region
      %s571 = ssub.s32 128, 128
      %572 = vsyncadd [#allocation4], %s571
      %s574 = sshll.u32 [#allocation10], 4
      %s575 = int_to_ptr.vmem [resolvable:$true] %s574
      %577 = dma.vmem_to_hbm [thread:$0]  %s575, 128, %s8, [#allocation4]
    $region53: #{tpu_custom_call.1} parent=1 // pred_fallthru
      _
    // Predicated region
    $region54: #{tpu_custom_call.1} parent=1 // pred_check
      _
    $region55: #{tpu_custom_call.1} parent=1 // pred_check_branch
      %579 = sbr.rel (0) target = $region57
    $region56: #{tpu_custom_call.1} parent=1 // pred_region
      %580 = dma.done [#allocation4], 128
    $region57: #{tpu_custom_call.1} parent=1 // pred_fallthru
      _
    %581 = vsyncpa [#allocation3], 1
    %582 = vsyncpa [#allocation6], 1
    %583 = vsyncpa [#allocation9], 1
    %584 = vsyncpa [#allocation4], 1

</llo_original>
